<compile_context>
chip_gen: v7x
topology: tpu7x:2x2x1
jax: 0.10.0
libtpu: 0.0.40
codegen_flags: <defaults>
</compile_context>

<pallas_src>
import functools
import math

import jax
import jax.numpy as jnp
from jax import lax
from jax.experimental import pallas as pl
from jax.experimental.pallas import tpu as pltpu


def _ntxent_kernel(q_ref, kT_ref, labels_ref, out_ref, *, batch_size):
    """One query-row tile: MXU logits, closed-form column pick, masked LSE."""
    TM = q_ref.shape[0]
    N = kT_ref.shape[1]
    row_start = pl.program_id(0) * TM

    # logits[i, j] = cos_sim(rep_{row_start+i}, rep_j) / temperature.
    # Inputs are pre-normalized (1/sqrt(T) folded in) and the key operand is
    # pre-transposed to (Dp, N), so this is a single clean MXU pass with no
    # in-kernel normalization or XLU transpose.
    logits = lax.dot_general(q_ref[...], kT_ref[...], (((1,), (0,)), ((), ())),
                             preferred_element_type=jnp.float32)        # (TM, N)

    col = lax.broadcasted_iota(jnp.int32, (TM, N), 1)                   # lane iota
    row = lax.broadcasted_iota(jnp.int32, (TM, 1), 0) + row_start       # (TM, 1)
    partner = jnp.where(row < batch_size, row + batch_size, row - batch_size)

    # Per-row target column, in closed form (no (TM, N) rank/mask temporaries):
    #   label == 0   -> the positive column (the partner view)
    #   label == k>0 -> the k-th negative column in column order; negatives
    #                   skip columns `row` and `partner`, hence the two shifts.
    labels = labels_ref[...]                                            # (TM, 1)
    lo = jnp.minimum(row, partner)
    hi = jnp.maximum(row, partner)
    neg_col = (labels - 1
               + (labels > lo).astype(jnp.int32)
               + (labels >= hi).astype(jnp.int32))
    target = jnp.where(labels == 0, partner, neg_col)                   # (TM, 1)
    # NOTE: out-of-range labels (> 2*batch_size - 2) select no column, so
    # picked == 0 and the row contributes its plain logsumexp (same as v2).

    picked = jnp.sum(jnp.where(col == target, logits, 0.0),
                     axis=-1, keepdims=True)                            # (TM, 1)

    # Row-wise logsumexp over the valid set = every column except the row
    # itself (exp of -1e30 underflows to 0).
    masked = jnp.where(col == row, jnp.float32(-1e30), logits)
    m = jnp.max(masked, axis=-1, keepdims=True)
    lse = m + jnp.log(jnp.sum(jnp.exp(masked - m), axis=-1, keepdims=True))

    out_ref[...] = lse - picked                                         # per-row CE


def _pick_tm(n):
    # Cap at 128: 256 blows the (TM, N) intermediate budget on v7x and buys
    # nothing on v5e's 4x128^2 MXU. Fall back to the largest divisor / full N.
    for tm in (128, 64, 32, 16, 8):
        if n % tm == 0:
            return tm
    return n


def ntxent_loss(zis, zjs, mask, labels, batch_size, temperature=0.5):
    """Forward pass of the PyTorch NTXentLoss module (returns a scalar)."""
    # `mask` is accepted for API parity with the PyTorch module but is assumed
    # to be the standard SimCLR correlated mask; the valid set for row i is
    # regenerated in-kernel from iota compares (saves the NxN bool DMA).
    del mask
    N = 2 * batch_size

    reps = jnp.concatenate([zjs, zis], axis=0).astype(jnp.float32)  # torch.cat([zjs, zis])
    D = reps.shape[1]
    Dp = ((D + 127) // 128) * 128                    # lane-dense / MXU-friendly
    if Dp != D:
        reps = jnp.pad(reps, ((0, 0), (0, Dp - D)))  # zeros: no effect on dot/norm

    # Hoisted cosine normalization with 1/sqrt(temperature) folded in, computed
    # ONCE here instead of on every grid step inside the kernel.  The in-kernel
    # matmul then directly produces cos_sim / temperature.
    # NOTE: clamps each ||row|| at 1e-8; torch's CosineSimilarity clamps the
    # *product* of the two norms at 1e-8 — differs only for near-zero rows.
    ss = jnp.sum(reps * reps, axis=-1, keepdims=True)
    scale = (lax.rsqrt(jnp.maximum(ss, jnp.float32(1e-16)))
             * jnp.float32(1.0 / math.sqrt(temperature)))
    reps_n = reps * scale                            # (N, Dp)  query operand
    reps_nT = reps_n.T                               # (Dp, N)  pre-transposed key operand

    labels_2d = labels.astype(jnp.int32).reshape(N, 1)

    TM = _pick_tm(N)
    grid = (N // TM,)

    # VMEM budget: key block (worst case: double-buffered) + pipelined query /
    # label / output tiles + a generous allowance for the (TM, N) temporaries.
    itemsize = 4
    working_set = (2 * Dp * N + 2 * TM * Dp + 4 * TM + 6 * TM * N) * itemsize
    vmem_limit = int(min(max(working_set + (4 << 20), 16 << 20), 100 << 20))

    kernel = functools.partial(_ntxent_kernel, batch_size=batch_size)

    def call(single_buffer_key):
        if single_buffer_key:
            # Constant index_map -> the block never changes: single-buffering
            # halves the resident-key VMEM footprint.
            key_spec = pl.BlockSpec((Dp, N), lambda i: (0, 0),
                                    pipeline_mode=pl.Buffered(1))
        else:
            key_spec = pl.BlockSpec((Dp, N), lambda i: (0, 0))
        return pl.pallas_call(
            kernel,
            out_shape=jax.ShapeDtypeStruct((N, 1), jnp.float32),
            grid=grid,
            in_specs=[
                pl.BlockSpec((TM, Dp), lambda i: (i, 0)),   # query rows (tiled)
                key_spec,                                   # all keys, VMEM resident
                pl.BlockSpec((TM, 1), lambda i: (i, 0)),    # labels for this tile
            ],
            out_specs=pl.BlockSpec((TM, 1), lambda i: (i, 0)),
            compiler_params=pltpu.CompilerParams(
                # "parallel": no-op on single-TC v5e/v6e, 2-TC sharding on v7x.
                dimension_semantics=("parallel",),
                vmem_limit_bytes=vmem_limit,
            ),
        )(reps_n, reps_nT, labels_2d)

    try:
        per_row = jax.block_until_ready(call(single_buffer_key=True))
    except Exception:
        # pipeline_mode=pl.Buffered(1) is not accepted by every jax / Mosaic
        # version; fall back to the default double-buffered resident block.
        per_row = call(single_buffer_key=False)

    return jnp.sum(per_row) / N                      # CrossEntropy(sum) / (2*batch_size)


if __name__ == "__main__":
    import numpy as np

    def correlated_mask(batch_size):
        n = 2 * batch_size
        diag = np.eye(n)
        l1 = np.eye(n, n, k=-batch_size)
        l2 = np.eye(n, n, k=batch_size)
        return (1 - (diag + l1 + l2)).astype(bool)

    def ref_loss(zis_, zjs_, labels_np, batch_size, temperature):
        n = 2 * batch_size
        reps = np.concatenate([np.asarray(zjs_), np.asarray(zis_)], 0).astype(np.float64)
        norms = np.linalg.norm(reps, axis=-1, keepdims=True)
        sim = (reps @ reps.T) / np.maximum(norms * norms.T, 1e-8)
        l_pos = np.diag(sim, batch_size)
        r_pos = np.diag(sim, -batch_size)
        positives = np.concatenate([l_pos, r_pos]).reshape(n, 1)
        negatives = sim[correlated_mask(batch_size)].reshape(n, -1)
        logits = np.concatenate([positives, negatives], axis=1) / temperature
        mx = logits.max(axis=1, keepdims=True)
        lse = mx[:, 0] + np.log(np.exp(logits - mx).sum(axis=1))
        picked = logits[np.arange(n), labels_np]
        return np.sum(lse - picked) / n

    def run_case(batch_size, D, labels_np, temperature=0.5):
        k1, k2 = jax.random.split(jax.random.PRNGKey(0))
        zis = jax.random.normal(k1, (batch_size, D), jnp.float32)
        zjs = jax.random.normal(k2, (batch_size, D), jnp.float32)
        mask = jnp.asarray(correlated_mask(batch_size))
        out = jax.block_until_ready(
            ntxent_loss(zis, zjs, mask, jnp.asarray(labels_np), batch_size, temperature))
        ref = ref_loss(zis, zjs, labels_np, batch_size, temperature)
        assert np.allclose(float(out), ref, rtol=1e-4, atol=1e-5), \
            (batch_size, float(out), ref)

    # 1) standard SimCLR labels (all zeros): the positive is class 0.
    run_case(4, 32, np.zeros((8,), np.int32))
    # 2) arbitrary labels exercise the negative-selection path.
    run_case(4, 32, np.array([0, 3, 6, 1, 2, 5, 4, 0], np.int32))
    # 3) N = 256 -> TM = 128, grid = 2: exercises row tiling / row_start logic
    #    and the VMEM-resident (single-buffered) key block.
    rng = np.random.RandomState(0)
    run_case(128, 32, rng.randint(0, 2 * 128 - 1, size=(256,)).astype(np.int32))

    print("KERNEL_OK")
</pallas_src>

<mosaic_0001>
module attributes {stable_mosaic.version = 11 : i64} {
  func.func @_ntxent_kernel(%arg0: i32, %arg1: memref<8x128xf32, #tpu.memory_space<vmem>>, %arg2: memref<128x8xf32, #tpu.memory_space<vmem>>, %arg3: memref<8x1xi32, #tpu.memory_space<vmem>>, %arg4: memref<8x1xf32, #tpu.memory_space<vmem>>) attributes {dimension_semantics = [#tpu.dimension_semantics<parallel>], iteration_bounds = array<i64: 1>, scalar_prefetch = 0 : i64, scratch_operands = 0 : i64, tpu.core_type = #tpu.core_type<tc>, window_params = [{transform_indices = @transform_0, window_bounds = array<i64: 8, 128>}, {pipeline_mode = #tpu.pipeline_mode<synchronous>, transform_indices = @transform_1, window_bounds = array<i64: 128, 8>}, {transform_indices = @transform_2, window_bounds = array<i64: 8, 1>}, {transform_indices = @transform_3, window_bounds = array<i64: 8, 1>}]} {
    %c8_i32 = arith.constant 8 : i32
    %0 = arith.muli %arg0, %c8_i32 : i32
    %c0 = arith.constant 0 : index
    %c0_0 = arith.constant 0 : index
    %1 = vector.load %arg1[%c0, %c0_0] : memref<8x128xf32, #tpu.memory_space<vmem>>, vector<8x128xf32>
    %c0_1 = arith.constant 0 : index
    %c0_2 = arith.constant 0 : index
    %2 = vector.load %arg2[%c0_1, %c0_2] : memref<128x8xf32, #tpu.memory_space<vmem>>, vector<128x8xf32>
    %cst = arith.constant dense<0.000000e+00> : vector<8x8xf32>
    %3 = tpu.matmul %1, %2, %cst {dimension_numbers = #tpu.dot_dimension_numbers<[1], [0], [0], [1], [0, 0, 1, 1], [], []>} : vector<8x128xf32>, vector<128x8xf32>, vector<8x8xf32> -> vector<8x8xf32>
    %4 = tpu.iota {dimensions = array<i32: 1>} : vector<8x8xi32>
    %5 = tpu.iota {dimensions = array<i32: 0>} : vector<8x1xi32>
    %6 = vector.broadcast %0 : i32 to vector<8x1xi32>
    %7 = arith.addi %5, %6 : vector<8x1xi32>
    %c4_i32 = arith.constant 4 : i32
    %8 = vector.broadcast %c4_i32 : i32 to vector<8x1xi32>
    %9 = arith.cmpi slt, %7, %8 : vector<8x1xi32>
    %c4_i32_3 = arith.constant 4 : i32
    %10 = vector.broadcast %c4_i32_3 : i32 to vector<8x1xi32>
    %11 = arith.addi %7, %10 : vector<8x1xi32>
    %c4_i32_4 = arith.constant 4 : i32
    %12 = vector.broadcast %c4_i32_4 : i32 to vector<8x1xi32>
    %13 = arith.subi %7, %12 : vector<8x1xi32>
    %14 = arith.select %9, %11, %13 : vector<8x1xi1>, vector<8x1xi32>
    %c0_5 = arith.constant 0 : index
    %c0_6 = arith.constant 0 : index
    %15 = vector.load %arg3[%c0_5, %c0_6] : memref<8x1xi32, #tpu.memory_space<vmem>>, vector<8x1xi32>
    %16 = arith.minsi %7, %14 : vector<8x1xi32>
    %17 = arith.maxsi %7, %14 : vector<8x1xi32>
    %c1_i32 = arith.constant 1 : i32
    %18 = vector.broadcast %c1_i32 : i32 to vector<8x1xi32>
    %19 = arith.subi %15, %18 : vector<8x1xi32>
    %20 = arith.cmpi sgt, %15, %16 : vector<8x1xi32>
    %21 = arith.extui %20 : vector<8x1xi1> to vector<8x1xi32>
    %22 = arith.addi %19, %21 : vector<8x1xi32>
    %23 = arith.cmpi sge, %15, %17 : vector<8x1xi32>
    %24 = arith.extui %23 : vector<8x1xi1> to vector<8x1xi32>
    %25 = arith.addi %22, %24 : vector<8x1xi32>
    %c0_i32 = arith.constant 0 : i32
    %26 = vector.broadcast %c0_i32 : i32 to vector<8x1xi32>
    %27 = arith.cmpi eq, %15, %26 : vector<8x1xi32>
    %28 = arith.select %27, %14, %25 : vector<8x1xi1>, vector<8x1xi32>
    %29 = vector.broadcast %28 : vector<8x1xi32> to vector<8x8xi32>
    %30 = arith.cmpi eq, %4, %29 : vector<8x8xi32>
    %cst_7 = arith.constant 0.000000e+00 : f32
    %31 = vector.broadcast %cst_7 : f32 to vector<8x8xf32>
    %32 = arith.select %30, %3, %31 : vector<8x8xi1>, vector<8x8xf32>
    %cst_8 = arith.constant dense<0.000000e+00> : vector<8xf32>
    %33 = vector.multi_reduction <add>, %32, %cst_8 [1] : vector<8x8xf32> to vector<8xf32>
    %34 = vector.shape_cast %33 : vector<8xf32> to vector<8x1xf32>
    %35 = vector.broadcast %7 : vector<8x1xi32> to vector<8x8xi32>
    %36 = arith.cmpi eq, %4, %35 : vector<8x8xi32>
    %cst_9 = arith.constant -1.000000e+30 : f32
    %37 = vector.broadcast %cst_9 : f32 to vector<8x8xf32>
    %38 = arith.select %36, %37, %3 : vector<8x8xi1>, vector<8x8xf32>
    %cst_10 = arith.constant dense<0xFF800000> : vector<8xf32>
    %39 = vector.multi_reduction <maximumf>, %38, %cst_10 [1] : vector<8x8xf32> to vector<8xf32>
    %40 = vector.shape_cast %39 : vector<8xf32> to vector<8x1xf32>
    %41 = vector.broadcast %40 : vector<8x1xf32> to vector<8x8xf32>
    %42 = arith.subf %38, %41 : vector<8x8xf32>
    %43 = math.exp %42 : vector<8x8xf32>
    %cst_11 = arith.constant dense<0.000000e+00> : vector<8xf32>
    %44 = vector.multi_reduction <add>, %43, %cst_11 [1] : vector<8x8xf32> to vector<8xf32>
    %45 = vector.shape_cast %44 : vector<8xf32> to vector<8x1xf32>
    %46 = math.log %45 : vector<8x1xf32>
    %47 = arith.addf %40, %46 : vector<8x1xf32>
    %48 = arith.subf %47, %34 : vector<8x1xf32>
    %c0_12 = arith.constant 0 : index
    %c0_13 = arith.constant 0 : index
    %49 = vector.load %arg4[%c0_12, %c0_13] : memref<8x1xf32, #tpu.memory_space<vmem>>, vector<8x1xf32>
    tpu.vector_store %arg4[%c0_12, %c0_13], %48 {strides = array<i32>} : memref<8x1xf32, #tpu.memory_space<vmem>>, vector<8x1xf32>,
    return
  }
  func.func @transform_0(%arg0: i32) -> (i32, i32) {
    %c0_i32 = arith.constant 0 : i32
    %c0_i32_0 = arith.constant 0 : i32
    return %arg0, %c0_i32 : i32, i32
  }
  func.func @transform_1(%arg0: i32) -> (i32, i32) {
    %c0_i32 = arith.constant 0 : i32
    %c0_i32_0 = arith.constant 0 : i32
    %c0_i32_1 = arith.constant 0 : i32
    return %c0_i32, %c0_i32_0 : i32, i32
  }
  func.func @transform_2(%arg0: i32) -> (i32, i32) {
    %c0_i32 = arith.constant 0 : i32
    %c0_i32_0 = arith.constant 0 : i32
    return %arg0, %c0_i32 : i32, i32
  }
  func.func @transform_3(%arg0: i32) -> (i32, i32) {
    %c0_i32 = arith.constant 0 : i32
    %c0_i32_0 = arith.constant 0 : i32
    return %arg0, %c0_i32 : i32, i32
  }
}

module attributes {stable_mosaic.version = 11 : i64} {
  func.func @_ntxent_kernel(%arg0: i32, %arg1: memref<8x128xf32, #tpu.memory_space<vmem>>, %arg2: memref<128x8xf32, #tpu.memory_space<vmem>>, %arg3: memref<8x1xi32, #tpu.memory_space<vmem>>, %arg4: memref<8x1xf32, #tpu.memory_space<vmem>>) attributes {dimension_semantics = [#tpu.dimension_semantics<parallel>], iteration_bounds = array<i64: 1>, scalar_prefetch = 0 : i64, scratch_operands = 0 : i64, tpu.core_type = #tpu.core_type<tc>, window_params = [{transform_indices = @transform_0, window_bounds = array<i64: 8, 128>}, {pipeline_mode = #tpu.pipeline_mode<synchronous>, transform_indices = @transform_1, window_bounds = array<i64: 128, 8>}, {transform_indices = @transform_2, window_bounds = array<i64: 8, 1>}, {transform_indices = @transform_3, window_bounds = array<i64: 8, 1>}]} {
    %c8_i32 = arith.constant 8 : i32
    %0 = arith.muli %arg0, %c8_i32 : i32
    %c0 = arith.constant 0 : index
    %c0_0 = arith.constant 0 : index
    %1 = vector.load %arg1[%c0, %c0_0] : memref<8x128xf32, #tpu.memory_space<vmem>>, vector<8x128xf32>
    %c0_1 = arith.constant 0 : index
    %c0_2 = arith.constant 0 : index
    %2 = vector.load %arg2[%c0_1, %c0_2] : memref<128x8xf32, #tpu.memory_space<vmem>>, vector<128x8xf32>
    %cst = arith.constant dense<0.000000e+00> : vector<8x8xf32>
    %3 = tpu.matmul %1, %2, %cst {dimension_numbers = #tpu.dot_dimension_numbers<[1], [0], [0], [1], [0, 0, 1, 1], [], []>} : vector<8x128xf32>, vector<128x8xf32>, vector<8x8xf32> -> vector<8x8xf32>
    %4 = tpu.iota {dimensions = array<i32: 1>} : vector<8x8xi32>
    %5 = tpu.iota {dimensions = array<i32: 0>} : vector<8x1xi32>
    %6 = vector.broadcast %0 : i32 to vector<8x1xi32>
    %7 = arith.addi %5, %6 : vector<8x1xi32>
    %c4_i32 = arith.constant 4 : i32
    %8 = vector.broadcast %c4_i32 : i32 to vector<8x1xi32>
    %9 = arith.cmpi slt, %7, %8 : vector<8x1xi32>
    %c4_i32_3 = arith.constant 4 : i32
    %10 = vector.broadcast %c4_i32_3 : i32 to vector<8x1xi32>
    %11 = arith.addi %7, %10 : vector<8x1xi32>
    %c4_i32_4 = arith.constant 4 : i32
    %12 = vector.broadcast %c4_i32_4 : i32 to vector<8x1xi32>
    %13 = arith.subi %7, %12 : vector<8x1xi32>
    %14 = arith.select %9, %11, %13 : vector<8x1xi1>, vector<8x1xi32>
    %c0_5 = arith.constant 0 : index
    %c0_6 = arith.constant 0 : index
    %15 = vector.load %arg3[%c0_5, %c0_6] : memref<8x1xi32, #tpu.memory_space<vmem>>, vector<8x1xi32>
    %16 = arith.minsi %7, %14 : vector<8x1xi32>
    %17 = arith.maxsi %7, %14 : vector<8x1xi32>
    %c1_i32 = arith.constant 1 : i32
    %18 = vector.broadcast %c1_i32 : i32 to vector<8x1xi32>
    %19 = arith.subi %15, %18 : vector<8x1xi32>
    %20 = arith.cmpi sgt, %15, %16 : vector<8x1xi32>
    %21 = arith.extui %20 : vector<8x1xi1> to vector<8x1xi32>
    %22 = arith.addi %19, %21 : vector<8x1xi32>
    %23 = arith.cmpi sge, %15, %17 : vector<8x1xi32>
    %24 = arith.extui %23 : vector<8x1xi1> to vector<8x1xi32>
    %25 = arith.addi %22, %24 : vector<8x1xi32>
    %c0_i32 = arith.constant 0 : i32
    %26 = vector.broadcast %c0_i32 : i32 to vector<8x1xi32>
    %27 = arith.cmpi eq, %15, %26 : vector<8x1xi32>
    %28 = arith.select %27, %14, %25 : vector<8x1xi1>, vector<8x1xi32>
    %29 = vector.broadcast %28 : vector<8x1xi32> to vector<8x8xi32>
    %30 = arith.cmpi eq, %4, %29 : vector<8x8xi32>
    %cst_7 = arith.constant 0.000000e+00 : f32
    %31 = vector.broadcast %cst_7 : f32 to vector<8x8xf32>
    %32 = arith.select %30, %3, %31 : vector<8x8xi1>, vector<8x8xf32>
    %cst_8 = arith.constant dense<0.000000e+00> : vector<8xf32>
    %33 = vector.multi_reduction <add>, %32, %cst_8 [1] : vector<8x8xf32> to vector<8xf32>
    %34 = vector.shape_cast %33 : vector<8xf32> to vector<8x1xf32>
    %35 = vector.broadcast %7 : vector<8x1xi32> to vector<8x8xi32>
    %36 = arith.cmpi eq, %4, %35 : vector<8x8xi32>
    %cst_9 = arith.constant -1.000000e+30 : f32
    %37 = vector.broadcast %cst_9 : f32 to vector<8x8xf32>
    %38 = arith.select %36, %37, %3 : vector<8x8xi1>, vector<8x8xf32>
    %cst_10 = arith.constant dense<0xFF800000> : vector<8xf32>
    %39 = vector.multi_reduction <maximumf>, %38, %cst_10 [1] : vector<8x8xf32> to vector<8xf32>
    %40 = vector.shape_cast %39 : vector<8xf32> to vector<8x1xf32>
    %41 = vector.broadcast %40 : vector<8x1xf32> to vector<8x8xf32>
    %42 = arith.subf %38, %41 : vector<8x8xf32>
    %43 = math.exp %42 : vector<8x8xf32>
    %cst_11 = arith.constant dense<0.000000e+00> : vector<8xf32>
    %44 = vector.multi_reduction <add>, %43, %cst_11 [1] : vector<8x8xf32> to vector<8xf32>
    %45 = vector.shape_cast %44 : vector<8xf32> to vector<8x1xf32>
    %46 = math.log %45 : vector<8x1xf32>
    %47 = arith.addf %40, %46 : vector<8x1xf32>
    %48 = arith.subf %47, %34 : vector<8x1xf32>
    %c0_12 = arith.constant 0 : index
    %c0_13 = arith.constant 0 : index
    %49 = vector.load %arg4[%c0_12, %c0_13] : memref<8x1xf32, #tpu.memory_space<vmem>>, vector<8x1xf32>
    tpu.vector_store %arg4[%c0_12, %c0_13], %48 {strides = array<i32>} : memref<8x1xf32, #tpu.memory_space<vmem>>, vector<8x1xf32>,
    return
  }
  func.func @transform_0(%arg0: i32) -> (i32, i32) {
    %c0_i32 = arith.constant 0 : i32
    %c0_i32_0 = arith.constant 0 : i32
    return %arg0, %c0_i32 : i32, i32
  }
  func.func @transform_1(%arg0: i32) -> (i32, i32) {
    %c0_i32 = arith.constant 0 : i32
    %c0_i32_0 = arith.constant 0 : i32
    %c0_i32_1 = arith.constant 0 : i32
    return %c0_i32, %c0_i32_0 : i32, i32
  }
  func.func @transform_2(%arg0: i32) -> (i32, i32) {
    %c0_i32 = arith.constant 0 : i32
    %c0_i32_0 = arith.constant 0 : i32
    return %arg0, %c0_i32 : i32, i32
  }
  func.func @transform_3(%arg0: i32) -> (i32, i32) {
    %c0_i32 = arith.constant 0 : i32
    %c0_i32_0 = arith.constant 0 : i32
    return %arg0, %c0_i32 : i32, i32
  }
}

</mosaic_0001>

<llo_original>
// kernel: tpu_custom_call.1
$region0: #{tpu_custom_call.1}
  #allocation0 [shape = 'u32[]', space=smem, size = 0x4, offset = 0x4, fixed_abs, tag = 'smem constant byte address 0x4 - core index']
  #allocation1 [shape = 'u32[144,128]{1,0:T(1,128)}', space=vmem, size = 0x12000, scoped, tag = 'internal scratch']
  %s0 = inlined_call_operand.vmem [shape: f32[8,128], index: 0, kind: input, shape index: {}]
  %s1 = inlined_call_operand.vmem [shape: f32[128,8], index: 1, kind: input, shape index: {}]
  %s2 = inlined_call_operand.vmem [shape: s32[8,1], index: 2, kind: input, shape index: {}]
  %s3 = inlined_call_operand.vmem [shape: f32[8,1], index: 3, kind: output, shape index: {}]
  %s4 = sld [smem:[#allocation0]]
  $region22: #{tpu_custom_call.1} parent=0
    _
  %s6 = ssub.s32 1, %s4
  %s7 = scalar_select 0, %s6, %s4
  // Predicated region
  $region2: #{tpu_custom_call.1} parent=0 // pred_check
    _
  $region3: #{tpu_custom_call.1} parent=0 // pred_check_branch
    %9 = sbr.rel (0) target = $region5
  $region4: #{tpu_custom_call.1} parent=0 // pred_region
    _
  $region5: #{tpu_custom_call.1} parent=0 // pred_fallthru
    _
  // Predicated region
  $region6: #{tpu_custom_call.1} parent=0 // pred_check
    _
  $region7: #{tpu_custom_call.1} parent=0 // pred_check_branch
    %11 = sbr.rel (0) target = $region9
  $region8: #{tpu_custom_call.1} parent=0 // pred_region
    _
  $region9: #{tpu_custom_call.1} parent=0 // pred_fallthru
    _
  // Predicated region
  $region10: #{tpu_custom_call.1} parent=0 // pred_check
    _
  $region11: #{tpu_custom_call.1} parent=0 // pred_check_branch
    %13 = sbr.rel (0) target = $region13
  $region12: #{tpu_custom_call.1} parent=0 // pred_region
    _
  $region13: #{tpu_custom_call.1} parent=0 // pred_fallthru
    _
  %s14 = smul.u32 0, 8
  %v15 = vld [vmem:[%s0] sm:$0xff]
  %v16 = vld [vmem:[%s1] sm:$0xff]
  %v17 = vld [vmem:[%s1 + $0x8] sm:$0xff]
  %v18 = vld [vmem:[%s1 + $0x10] sm:$0xff]
  %v19 = vld [vmem:[%s1 + $0x18] sm:$0xff]
  %v20 = vld [vmem:[%s1 + $0x20] sm:$0xff]
  %v21 = vld [vmem:[%s1 + $0x28] sm:$0xff]
  %v22 = vld [vmem:[%s1 + $0x30] sm:$0xff]
  %v23 = vld [vmem:[%s1 + $0x38] sm:$0xff]
  %v24 = vld [vmem:[%s1 + $0x40] sm:$0xff]
  %v25 = vld [vmem:[%s1 + $0x48] sm:$0xff]
  %v26 = vld [vmem:[%s1 + $0x50] sm:$0xff]
  %v27 = vld [vmem:[%s1 + $0x58] sm:$0xff]
  %v28 = vld [vmem:[%s1 + $0x60] sm:$0xff]
  %v29 = vld [vmem:[%s1 + $0x68] sm:$0xff]
  %v30 = vld [vmem:[%s1 + $0x70] sm:$0xff]
  %v31 = vld [vmem:[%s1 + $0x78] sm:$0xff]
  %32 = vmatprep.subr.mxu0 0.0
  %33 = vmatpush1.msra.mxu0 %v16
  %34 = vmatprep.subr.mxu0 0.0
  %35 = vmatpush1.msra.mxu0 %v17
  %36 = vmatprep.subr.mxu0 0.0
  %37 = vmatpush1.msra.mxu0 %v18
  %38 = vmatprep.subr.mxu0 0.0
  %39 = vmatpush1.msra.mxu0 %v19
  %40 = vmatprep.subr.mxu0 0.0
  %41 = vmatpush1.msra.mxu0 %v20
  %42 = vmatprep.subr.mxu0 0.0
  %43 = vmatpush1.msra.mxu0 %v21
  %44 = vmatprep.subr.mxu0 0.0
  %45 = vmatpush1.msra.mxu0 %v22
  %46 = vmatprep.subr.mxu0 0.0
  %47 = vmatpush1.msra.mxu0 %v23
  %48 = vmatprep.subr.mxu0 0.0
  %49 = vmatpush1.msra.mxu0 %v24
  %50 = vmatprep.subr.mxu0 0.0
  %51 = vmatpush1.msra.mxu0 %v25
  %52 = vmatprep.subr.mxu0 0.0
  %53 = vmatpush1.msra.mxu0 %v26
  %54 = vmatprep.subr.mxu0 0.0
  %55 = vmatpush1.msra.mxu0 %v27
  %56 = vmatprep.subr.mxu0 0.0
  %57 = vmatpush1.msra.mxu0 %v28
  %58 = vmatprep.subr.mxu0 0.0
  %59 = vmatpush1.msra.mxu0 %v29
  %60 = vmatprep.subr.mxu0 0.0
  %61 = vmatpush1.msra.mxu0 %v30
  %62 = vmatprep.subr.mxu0 0.0
  %63 = vmatpush1.msra.mxu0 %v31
  %64 = vmatprep.subr.mxu0 0.0
  %65 = vmatpush1.msra.mxu0 0.0
  %66 = vmatprep.subr.mxu0 0.0
  %67 = vmatpush1.msra.mxu0 0.0
  %68 = vmatprep.subr.mxu0 0.0
  %69 = vmatpush1.msra.mxu0 0.0
  %70 = vmatprep.subr.mxu0 0.0
  %71 = vmatpush1.msra.mxu0 0.0
  %72 = vmatprep.subr.mxu0 0.0
  %73 = vmatpush1.msra.mxu0 0.0
  %74 = vmatprep.subr.mxu0 0.0
  %75 = vmatpush1.msra.mxu0 0.0
  %76 = vmatprep.subr.mxu0 0.0
  %77 = vmatpush1.msra.mxu0 0.0
  %78 = vmatprep.subr.mxu0 0.0
  %79 = vmatpush1.msra.mxu0 0.0
  %80 = vmatprep.subr.mxu0 0.0
  %81 = vmatpush1.msra.mxu0 0.0
  %82 = vmatprep.subr.mxu0 0.0
  %83 = vmatpush1.msra.mxu0 0.0
  %84 = vmatprep.subr.mxu0 0.0
  %85 = vmatpush1.msra.mxu0 0.0
  %86 = vmatprep.subr.mxu0 0.0
  %87 = vmatpush1.msra.mxu0 0.0
  %88 = vmatprep.subr.mxu0 0.0
  %89 = vmatpush1.msra.mxu0 0.0
  %90 = vmatprep.subr.mxu0 0.0
  %91 = vmatpush1.msra.mxu0 0.0
  %92 = vmatprep.subr.mxu0 0.0
  %93 = vmatpush1.msra.mxu0 0.0
  %94 = vmatprep.subr.mxu0 0.0
  %95 = vmatpush1.msra.mxu0 0.0
  %96 = vmatprep.mubr.f32.mxu0 0.0
  %97 = vmatmul.mubr.f32.gmra.mrb[0].mxu0 %v15
  %v98 = vpop.f32.mrb[0].mxu0
  %v99 = vadd.f32 0.0, %v98
  %v100 = vpop.f32.mrb[0].mxu0
  %101 = vdwg.mxu0
  %v102 = vlaneseq
  %v103 = vand.u32 %v102, 127
  %v104 = vlaneseq
  %v105 = vshrl.u32 %v104, 7
  %v106 = vstv %s14
  %v107 = vadd.s32 %v105, %v106
  %vm108 = vcmp.lt.s32.totalorder %v107, 4
  %v109 = vadd.s32 %v107, 4
  %v110 = vsub.s32 %v107, 4
  %v111 = vsel %vm108, %v109, %v110
  %v112 = vld [vmem:[%s2] sm:$0xff]
  %vm113 = vcmp.lt.s32.totalorder %v107, %v111
  %v114 = vsel %vm113, %v107, %v111
  %vm115 = vcmp.gt.s32.totalorder %v107, %v111
  %v116 = vsel %vm115, %v107, %v111
  %v117 = vsub.s32 %v112, 1
  %vm118 = vcmp.gt.s32.totalorder %v112, %v114
  %v119 = vsel %vm118, 1, 0
  %v120 = vadd.s32 %v117, %v119
  %vm121 = vcmp.ge.s32.totalorder %v112, %v116
  %v122 = vsel %vm121, 1, 0
  %v123 = vadd.s32 %v120, %v122
  %vm124 = vcmp.eq.s32.totalorder %v112, 0
  %v125 = vsel %vm124, %v111, %v123
  %126 = vset.pattern.permute.xlu0 0
  %127 = vperm.xlu0 %126, %v125
  %v128 = vpop.permute.xlu0 %127
  %vm129 = vcmp.eq.s32.totalorder %v103, %v128
  %v130 = vsel %vm129, %v99, 0.0
  %vm131 = vcmask 64512
  %v132 = vsel %vm131, %v130, 0.0
  %133 = vadd.xlane.f32.xlu0 %v132
  %v134 = vpop.xlane.xlu0 %133
  %vm135 = vcmp.eq.s32.totalorder %v103, %v107
  %v136 = vsel %vm135, -1e+30, %v99
  %v137 = vsel %vm131, %v136, -inf
  %138 = vmax.xlane.f32.xlu0 %v137
  %v139 = vpop.xlane.xlu0 %138
  %v140 = vsub.f32 %v136, %v139
  %v141 = vmul.f32 %v140, 1.442695
  %v142 = vpow.pop %v141
  %v143 = vsel %vm131, %v142, 0.0
  %144 = vadd.xlane.f32.xlu0 %v143
  %v145 = vpop.xlane.xlu0 %144
  %v146 = vlog2.pop %v145
  %v147 = vmul.f32 %v146, 0.6931472
  %v148 = vadd.f32 %v139, %v147
  %v149 = vsub.f32 %v148, %v134
  %vm150 = vcmask 7168
  %151 = vst.msk [vmem:[%s3] sm:$0xff] %vm150, %v149
  // Predicated region
  $region14: #{tpu_custom_call.1} parent=0 // pred_check
    _
  $region15: #{tpu_custom_call.1} parent=0 // pred_check_branch
    %153 = sbr.rel (0) target = $region17
  $region16: #{tpu_custom_call.1} parent=0 // pred_region
    _
  $region17: #{tpu_custom_call.1} parent=0 // pred_fallthru
    _
  // Predicated region
  $region18: #{tpu_custom_call.1} parent=0 // pred_check
    _
  $region19: #{tpu_custom_call.1} parent=0 // pred_check_branch
    %155 = sbr.rel (0) target = $region21
  $region20: #{tpu_custom_call.1} parent=0 // pred_region
    _
  $region21: #{tpu_custom_call.1} parent=0 // pred_fallthru
    _

// kernel: tpu_custom_call.1
$region0: #{tpu_custom_call.1}
  #allocation0 [shape = 'u32[]', space=smem, size = 0x4, offset = 0x4, fixed_abs, tag = 'smem constant byte address 0x4 - core index']
  #allocation1 [shape = 'u32[144,128]{1,0:T(1,128)}', space=vmem, size = 0x12000, scoped, tag = 'internal scratch']
  %s0 = inlined_call_operand.vmem [shape: f32[8,128], index: 0, kind: input, shape index: {}]
  %s1 = inlined_call_operand.vmem [shape: f32[128,8], index: 1, kind: input, shape index: {}]
  %s2 = inlined_call_operand.vmem [shape: s32[8,1], index: 2, kind: input, shape index: {}]
  %s3 = inlined_call_operand.vmem [shape: f32[8,1], index: 3, kind: output, shape index: {}]
  %s4 = sld [smem:[#allocation0]]
  $region22: #{tpu_custom_call.1} parent=0
    _
  %s6 = ssub.s32 1, %s4
  %s7 = scalar_select 0, %s6, %s4
  // Predicated region
  $region2: #{tpu_custom_call.1} parent=0 // pred_check
    _
  $region3: #{tpu_custom_call.1} parent=0 // pred_check_branch
    %9 = sbr.rel (0) target = $region5
  $region4: #{tpu_custom_call.1} parent=0 // pred_region
    _
  $region5: #{tpu_custom_call.1} parent=0 // pred_fallthru
    _
  // Predicated region
  $region6: #{tpu_custom_call.1} parent=0 // pred_check
    _
  $region7: #{tpu_custom_call.1} parent=0 // pred_check_branch
    %11 = sbr.rel (0) target = $region9
  $region8: #{tpu_custom_call.1} parent=0 // pred_region
    _
  $region9: #{tpu_custom_call.1} parent=0 // pred_fallthru
    _
  // Predicated region
  $region10: #{tpu_custom_call.1} parent=0 // pred_check
    _
  $region11: #{tpu_custom_call.1} parent=0 // pred_check_branch
    %13 = sbr.rel (0) target = $region13
  $region12: #{tpu_custom_call.1} parent=0 // pred_region
    _
  $region13: #{tpu_custom_call.1} parent=0 // pred_fallthru
    _
  %s14 = smul.u32 0, 8
  %v15 = vld [vmem:[%s0] sm:$0xff]
  %v16 = vld [vmem:[%s1] sm:$0xff]
  %v17 = vld [vmem:[%s1 + $0x8] sm:$0xff]
  %v18 = vld [vmem:[%s1 + $0x10] sm:$0xff]
  %v19 = vld [vmem:[%s1 + $0x18] sm:$0xff]
  %v20 = vld [vmem:[%s1 + $0x20] sm:$0xff]
  %v21 = vld [vmem:[%s1 + $0x28] sm:$0xff]
  %v22 = vld [vmem:[%s1 + $0x30] sm:$0xff]
  %v23 = vld [vmem:[%s1 + $0x38] sm:$0xff]
  %v24 = vld [vmem:[%s1 + $0x40] sm:$0xff]
  %v25 = vld [vmem:[%s1 + $0x48] sm:$0xff]
  %v26 = vld [vmem:[%s1 + $0x50] sm:$0xff]
  %v27 = vld [vmem:[%s1 + $0x58] sm:$0xff]
  %v28 = vld [vmem:[%s1 + $0x60] sm:$0xff]
  %v29 = vld [vmem:[%s1 + $0x68] sm:$0xff]
  %v30 = vld [vmem:[%s1 + $0x70] sm:$0xff]
  %v31 = vld [vmem:[%s1 + $0x78] sm:$0xff]
  %32 = vmatprep.subr.mxu0 0.0
  %33 = vmatpush1.msra.mxu0 %v16
  %34 = vmatprep.subr.mxu0 0.0
  %35 = vmatpush1.msra.mxu0 %v17
  %36 = vmatprep.subr.mxu0 0.0
  %37 = vmatpush1.msra.mxu0 %v18
  %38 = vmatprep.subr.mxu0 0.0
  %39 = vmatpush1.msra.mxu0 %v19
  %40 = vmatprep.subr.mxu0 0.0
  %41 = vmatpush1.msra.mxu0 %v20
  %42 = vmatprep.subr.mxu0 0.0
  %43 = vmatpush1.msra.mxu0 %v21
  %44 = vmatprep.subr.mxu0 0.0
  %45 = vmatpush1.msra.mxu0 %v22
  %46 = vmatprep.subr.mxu0 0.0
  %47 = vmatpush1.msra.mxu0 %v23
  %48 = vmatprep.subr.mxu0 0.0
  %49 = vmatpush1.msra.mxu0 %v24
  %50 = vmatprep.subr.mxu0 0.0
  %51 = vmatpush1.msra.mxu0 %v25
  %52 = vmatprep.subr.mxu0 0.0
  %53 = vmatpush1.msra.mxu0 %v26
  %54 = vmatprep.subr.mxu0 0.0
  %55 = vmatpush1.msra.mxu0 %v27
  %56 = vmatprep.subr.mxu0 0.0
  %57 = vmatpush1.msra.mxu0 %v28
  %58 = vmatprep.subr.mxu0 0.0
  %59 = vmatpush1.msra.mxu0 %v29
  %60 = vmatprep.subr.mxu0 0.0
  %61 = vmatpush1.msra.mxu0 %v30
  %62 = vmatprep.subr.mxu0 0.0
  %63 = vmatpush1.msra.mxu0 %v31
  %64 = vmatprep.subr.mxu0 0.0
  %65 = vmatpush1.msra.mxu0 0.0
  %66 = vmatprep.subr.mxu0 0.0
  %67 = vmatpush1.msra.mxu0 0.0
  %68 = vmatprep.subr.mxu0 0.0
  %69 = vmatpush1.msra.mxu0 0.0
  %70 = vmatprep.subr.mxu0 0.0
  %71 = vmatpush1.msra.mxu0 0.0
  %72 = vmatprep.subr.mxu0 0.0
  %73 = vmatpush1.msra.mxu0 0.0
  %74 = vmatprep.subr.mxu0 0.0
  %75 = vmatpush1.msra.mxu0 0.0
  %76 = vmatprep.subr.mxu0 0.0
  %77 = vmatpush1.msra.mxu0 0.0
  %78 = vmatprep.subr.mxu0 0.0
  %79 = vmatpush1.msra.mxu0 0.0
  %80 = vmatprep.subr.mxu0 0.0
  %81 = vmatpush1.msra.mxu0 0.0
  %82 = vmatprep.subr.mxu0 0.0
  %83 = vmatpush1.msra.mxu0 0.0
  %84 = vmatprep.subr.mxu0 0.0
  %85 = vmatpush1.msra.mxu0 0.0
  %86 = vmatprep.subr.mxu0 0.0
  %87 = vmatpush1.msra.mxu0 0.0
  %88 = vmatprep.subr.mxu0 0.0
  %89 = vmatpush1.msra.mxu0 0.0
  %90 = vmatprep.subr.mxu0 0.0
  %91 = vmatpush1.msra.mxu0 0.0
  %92 = vmatprep.subr.mxu0 0.0
  %93 = vmatpush1.msra.mxu0 0.0
  %94 = vmatprep.subr.mxu0 0.0
  %95 = vmatpush1.msra.mxu0 0.0
  %96 = vmatprep.mubr.f32.mxu0 0.0
  %97 = vmatmul.mubr.f32.gmra.mrb[0].mxu0 %v15
  %v98 = vpop.f32.mrb[0].mxu0
  %v99 = vadd.f32 0.0, %v98
  %v100 = vpop.f32.mrb[0].mxu0
  %101 = vdwg.mxu0
  %v102 = vlaneseq
  %v103 = vand.u32 %v102, 127
  %v104 = vlaneseq
  %v105 = vshrl.u32 %v104, 7
  %v106 = vstv %s14
  %v107 = vadd.s32 %v105, %v106
  %vm108 = vcmp.lt.s32.totalorder %v107, 4
  %v109 = vadd.s32 %v107, 4
  %v110 = vsub.s32 %v107, 4
  %v111 = vsel %vm108, %v109, %v110
  %v112 = vld [vmem:[%s2] sm:$0xff]
  %vm113 = vcmp.lt.s32.totalorder %v107, %v111
  %v114 = vsel %vm113, %v107, %v111
  %vm115 = vcmp.gt.s32.totalorder %v107, %v111
  %v116 = vsel %vm115, %v107, %v111
  %v117 = vsub.s32 %v112, 1
  %vm118 = vcmp.gt.s32.totalorder %v112, %v114
  %v119 = vsel %vm118, 1, 0
  %v120 = vadd.s32 %v117, %v119
  %vm121 = vcmp.ge.s32.totalorder %v112, %v116
  %v122 = vsel %vm121, 1, 0
  %v123 = vadd.s32 %v120, %v122
  %vm124 = vcmp.eq.s32.totalorder %v112, 0
  %v125 = vsel %vm124, %v111, %v123
  %126 = vset.pattern.permute.xlu0 0
  %127 = vperm.xlu0 %126, %v125
  %v128 = vpop.permute.xlu0 %127
  %vm129 = vcmp.eq.s32.totalorder %v103, %v128
  %v130 = vsel %vm129, %v99, 0.0
  %vm131 = vcmask 64512
  %v132 = vsel %vm131, %v130, 0.0
  %133 = vadd.xlane.f32.xlu0 %v132
  %v134 = vpop.xlane.xlu0 %133
  %vm135 = vcmp.eq.s32.totalorder %v103, %v107
  %v136 = vsel %vm135, -1e+30, %v99
  %v137 = vsel %vm131, %v136, -inf
  %138 = vmax.xlane.f32.xlu0 %v137
  %v139 = vpop.xlane.xlu0 %138
  %v140 = vsub.f32 %v136, %v139
  %v141 = vmul.f32 %v140, 1.442695
  %v142 = vpow.pop %v141
  %v143 = vsel %vm131, %v142, 0.0
  %144 = vadd.xlane.f32.xlu0 %v143
  %v145 = vpop.xlane.xlu0 %144
  %v146 = vlog2.pop %v145
  %v147 = vmul.f32 %v146, 0.6931472
  %v148 = vadd.f32 %v139, %v147
  %v149 = vsub.f32 %v148, %v134
  %vm150 = vcmask 7168
  %151 = vst.msk [vmem:[%s3] sm:$0xff] %vm150, %v149
  // Predicated region
  $region14: #{tpu_custom_call.1} parent=0 // pred_check
    _
  $region15: #{tpu_custom_call.1} parent=0 // pred_check_branch
    %153 = sbr.rel (0) target = $region17
  $region16: #{tpu_custom_call.1} parent=0 // pred_region
    _
  $region17: #{tpu_custom_call.1} parent=0 // pred_fallthru
    _
  // Predicated region
  $region18: #{tpu_custom_call.1} parent=0 // pred_check
    _
  $region19: #{tpu_custom_call.1} parent=0 // pred_check_branch
    %155 = sbr.rel (0) target = $region21
  $region20: #{tpu_custom_call.1} parent=0 // pred_region
    _
  $region21: #{tpu_custom_call.1} parent=0 // pred_fallthru
    _

</llo_original>
